<compile_context>
chip_gen: v7x
topology: tpu7x:2x2x1
jax: 0.10.0
libtpu: 0.0.40
codegen_flags: <defaults>
</compile_context>

<pallas_src>
import functools

import jax
import jax.numpy as jnp
import numpy as np
from jax.experimental import pallas as pl
from jax.experimental.pallas import tpu as pltpu

# ------------------------------------------------------------------ config --
CONFIG = dict(
    F=4,                      # -> X feature width = 2*F + 1 = 9
    no_flat_features=7,
    num_layers_lstm=2,
    h_dim_lstm=32,
    lstm_dropout=0.0,         # identity at inference
)

S = 8                         # sequence length (nn.LSTM dim 0)
B = 2                         # batch            (nn.LSTM dim 1)
FX = 2 * CONFIG["F"] + 1      # 9   X features
NF = CONFIG["no_flat_features"]   # 7  flat features
H = CONFIG["h_dim_lstm"]      # 32
G = 4 * H                     # 128 gate width (i, f, g, o)
BP = 8                        # padded working batch (one sublane group)
KP = 32                       # padded input-feature width (NF + FX + 2 bias cols <= KP)


# ------------------------------------------------------------------ kernel --
def _lstm_encoder_kernel(xin_ref, w_in_ref, w_rec_ref, out_ref, *,
                         seq_len, bp, hidden):
    Sl, Bb, Hh = seq_len, bp, hidden
    G8 = 8 * Hh

    # Gate fixup constants: weights are pre-halved on i/f/o columns, so
    # tanh(gates) * mul + add gives sigmoid for i/f/o and tanh for g.
    lane = jax.lax.broadcasted_iota(jnp.int32, (1, G8), 1)
    is_g = jnp.logical_and(lane >= 4 * Hh, lane < 6 * Hh)
    mul8 = jnp.where(is_g, 1.0, 0.5)
    add8 = jnp.where(is_g, 0.0, 0.5)

    # Hoisted input projection for ALL (S+1) step blocks; both layers' biases
    # and the flat-feature broadcast are already folded into the weight slab.
    gxfb = jnp.dot(xin_ref[...], w_in_ref[...],
                   preferred_element_type=jnp.float32)       # [(S+1)*BP, 8H]
    w_rec = w_rec_ref[...]                                   # [2H, 8H]

    # Combined state: columns [0:H) = layer-0, [H:2H) = layer-1.
    h_cat = jnp.zeros((Bb, 2 * Hh), jnp.float32)
    c_cat = jnp.zeros((Bb, 2 * Hh), jnp.float32)
    outs = []

    # TODO(synk): inter-layer dropout (lstm_dropout) is identity in eval mode.
    # Skewed recurrence: skewed step tau runs layer-0 @ t=tau and layer-1 @ t=tau-1.
    for tau in range(Sl + 1):
        gates = gxfb[tau * Bb:(tau + 1) * Bb, :]             # aligned [8, 8H] slice
        if tau > 0:  # tau == 0: initial state is zero, recurrent term vanishes
            gates = gates + jnp.dot(h_cat, w_rec,
                                    preferred_element_type=jnp.float32)
        act = jnp.tanh(gates) * mul8 + add8                  # ONE EUP op, both cells
        i_cat = act[:, 0 * Hh:2 * Hh]
        f_cat = act[:, 2 * Hh:4 * Hh]
        g_cat = act[:, 4 * Hh:6 * Hh]
        o_cat = act[:, 6 * Hh:8 * Hh]
        c_cat = f_cat * c_cat + i_cat * g_cat
        h_cat = o_cat * jnp.tanh(c_cat)                      # second (last) EUP op
        if tau > 0:
            outs.append(h_cat[:, Hh:2 * Hh])                 # h1 at time tau-1

    # Single lane-dense store: [BP, S*H] = [8, 256].
    out_ref[...] = jnp.concatenate(outs, axis=1)


# -------------------------------------------------------- weight packing ----
def pack_params(params, kp=KP):
    """One-time packing of the 8 LSTM tensors into 2 MXU-friendly slabs."""
    f32 = jnp.float32
    w_ih0 = jnp.asarray(params["w_ih_l0"], f32)              # [4H, NF+FX]
    w_hh0 = jnp.asarray(params["w_hh_l0"], f32)              # [4H, H]
    w_ih1 = jnp.asarray(params["w_ih_l1"], f32)              # [4H, H]
    w_hh1 = jnp.asarray(params["w_hh_l1"], f32)              # [4H, H]
    b0 = jnp.asarray(params["b_ih_l0"], f32) + jnp.asarray(params["b_hh_l0"], f32)
    b1 = jnp.asarray(params["b_ih_l1"], f32) + jnp.asarray(params["b_hh_l1"], f32)

    g4, in_feat = w_ih0.shape
    h = g4 // 4

    def interleave(a, c):
        # [..., 4H] gate blocks [i|f|g|o] of layer0 (a) / layer1 (c)
        #   -> [..., 8H] layer-interleaved [i0 i1 f0 f1 g0 g1 o0 o1]
        parts = []
        for q in range(4):
            parts.append(a[..., q * h:(q + 1) * h])
            parts.append(c[..., q * h:(q + 1) * h])
        return jnp.concatenate(parts, axis=-1)

    # sigmoid-as-tanh prescale: halve every i/f/o gate column (g untouched).
    col8 = jnp.arange(8 * h)
    pres8 = jnp.where((col8 >= 4 * h) & (col8 < 6 * h), 1.0, 0.5).astype(f32)

    z_in = jnp.zeros((in_feat, g4), f32)
    z_h = jnp.zeros((h, g4), f32)
    z_b = jnp.zeros((1, g4), f32)

    # Input-projection slab [KP, 8H]: rows = [Wih0^T | 0], [b0 | 0], [0 | b1], 0-pad.
    w_in8 = jnp.concatenate([interleave(w_ih0.T, z_in),
                             interleave(b0[None, :], z_b),
                             interleave(z_b, b1[None, :])], axis=0)
    w_in8 = jnp.pad(w_in8, ((0, kp - w_in8.shape[0]), (0, 0))) * pres8[None, :]

    # Fused recurrent slab [2H, 8H]: rows 0:H multiply h0 -> [Whh0 | Wih1],
    # rows H:2H multiply h1 -> [0 | Whh1].
    w_rec = jnp.concatenate([interleave(w_hh0.T, w_ih1.T),
                             interleave(z_h, w_hh1.T)], axis=0) * pres8[None, :]

    return dict(w_in8=w_in8, w_rec=w_rec)


# ----------------------------------------------------------------- wrapper --
@jax.jit
def lstm_encoder(x, flat, w_in8, w_rec):
    """x: [S, B, 2F+1], flat: [S, 1, NF]  ->  encoding [S, B, H]."""
    s, b, fx = x.shape
    nf = flat.shape[-1]
    h = w_rec.shape[0] // 2
    kp = w_in8.shape[0]

    # Data slab [(S+1)*BP, KP]: cols [0:NF) flat, [NF:NF+FX) x, col NF+FX = 1
    # (layer-0 bias), col NF+FX+1 = 1 (layer-1 bias, active from step-block 1 so
    # the skewed warm-up step produces exact zeros for layer-1).
    flat_rep = jnp.broadcast_to(flat.astype(jnp.float32), (s, b, nf))
    xin = jnp.zeros((s + 1, BP, kp), jnp.float32)
    xin = xin.at[:s, :b, :nf].set(flat_rep)
    xin = xin.at[:s, :b, nf:nf + fx].set(x.astype(jnp.float32))
    xin = xin.at[:s, :b, nf + fx].set(1.0)
    xin = xin.at[1:, :b, nf + fx + 1].set(1.0)
    xin = xin.reshape((s + 1) * BP, kp)

    kernel = functools.partial(_lstm_encoder_kernel, seq_len=s, bp=BP, hidden=h)
    # TODO(synk): for many independent sequences, add a leading "parallel" grid
    # axis so both v7x TensorCores are used; a single sequence stays no-grid.
    out = pl.pallas_call(
        kernel,
        out_shape=jax.ShapeDtypeStruct((BP, s * h), jnp.float32),
        in_specs=[pl.BlockSpec(memory_space=pltpu.MemorySpace.VMEM)] * 3,
        out_specs=pl.BlockSpec(memory_space=pltpu.MemorySpace.VMEM),
    )(xin, w_in8, w_rec)

    # out[b, t*H + j]  ->  [S, B, H]
    return out[:b].reshape(b, s, h).transpose(1, 0, 2)


# --------------------------------------------------------- pure-JAX ref -----
def lstm_encoder_ref(x, flat, p):
    """Mirrors the PyTorch forward (eval mode) exactly."""
    s, b, _ = x.shape
    h_dim = p["w_hh_l0"].shape[1]
    hp = jax.lax.Precision.HIGHEST

    flat_rep = jnp.tile(flat, (1, b, 1))               # flat.repeat(1, X.shape[1], 1)
    xin = jnp.concatenate([flat_rep, x], axis=2)       # torch.cat([flat_rep, X], dim=2)

    def run_layer(inp, w_ih, w_hh, b_ih, b_hh):
        def step(carry, x_t):
            hprev, cprev = carry
            gates = (jnp.dot(x_t, w_ih.T, precision=hp) + b_ih
                     + jnp.dot(hprev, w_hh.T, precision=hp) + b_hh)
            i, f, g, o = jnp.split(gates, 4, axis=-1)
            i = jax.nn.sigmoid(i)
            f = jax.nn.sigmoid(f)
            g = jnp.tanh(g)
            o = jax.nn.sigmoid(o)
            c = f * cprev + i * g
            hnew = o * jnp.tanh(c)
            return (hnew, c), hnew
        init = (jnp.zeros((b, h_dim), jnp.float32),
                jnp.zeros((b, h_dim), jnp.float32))
        _, hs = jax.lax.scan(step, init, inp)
        return hs                                       # [S, B, H]

    out = run_layer(xin, p["w_ih_l0"], p["w_hh_l0"], p["b_ih_l0"], p["b_hh_l0"])
    out = run_layer(out, p["w_ih_l1"], p["w_hh_l1"], p["b_ih_l1"], p["b_hh_l1"])
    return out                                          # encoding (all timesteps)


# ------------------------------------------------------------------ main ----
if __name__ == "__main__":
    key = jax.random.PRNGKey(0)
    ks = jax.random.split(key, 12)

    x = jax.random.normal(ks[0], (S, B, FX), jnp.float32)
    flat = jax.random.normal(ks[1], (S, 1, NF), jnp.float32)

    sc = 0.2
    params = {
        "w_ih_l0": jax.random.normal(ks[2], (G, NF + FX), jnp.float32) * sc,
        "w_hh_l0": jax.random.normal(ks[3], (G, H), jnp.float32) * sc,
        "b_ih_l0": jax.random.normal(ks[4], (G,), jnp.float32) * 0.1,
        "b_hh_l0": jax.random.normal(ks[5], (G,), jnp.float32) * 0.1,
        "w_ih_l1": jax.random.normal(ks[6], (G, H), jnp.float32) * sc,
        "w_hh_l1": jax.random.normal(ks[7], (G, H), jnp.float32) * sc,
        "b_ih_l1": jax.random.normal(ks[8], (G,), jnp.float32) * 0.1,
        "b_hh_l1": jax.random.normal(ks[9], (G,), jnp.float32) * 0.1,
    }

    packed = pack_params(params)                         # one-time, off hot path
    out = jax.block_until_ready(
        lstm_encoder(x, flat, packed["w_in8"], packed["w_rec"]))
    ref = jax.block_until_ready(lstm_encoder_ref(x, flat, params))

    np.testing.assert_allclose(np.asarray(out), np.asarray(ref),
                               rtol=2e-4, atol=2e-4)
    assert out.shape == (S, B, H)
    print("KERNEL_OK")
</pallas_src>

<mosaic_0001>
module attributes {stable_mosaic.version = 11 : i64} {
  func.func @_lstm_encoder_kernel(%arg0: memref<72x32xf32, #tpu.memory_space<vmem>>, %arg1: memref<32x256xf32, #tpu.memory_space<vmem>>, %arg2: memref<64x256xf32, #tpu.memory_space<vmem>>, %arg3: memref<8x256xf32, #tpu.memory_space<vmem>>) attributes {dimension_semantics = [], scalar_prefetch = 0 : i64, scratch_operands = 0 : i64, tpu.core_type = #tpu.core_type<tc>} {
    %0 = tpu.iota {dimensions = array<i32: 1>} : vector<1x256xi32>
    %c128_i32 = arith.constant 128 : i32
    %1 = vector.broadcast %c128_i32 : i32 to vector<1x256xi32>
    %2 = arith.cmpi sge, %0, %1 : vector<1x256xi32>
    %c192_i32 = arith.constant 192 : i32
    %3 = vector.broadcast %c192_i32 : i32 to vector<1x256xi32>
    %4 = arith.cmpi slt, %0, %3 : vector<1x256xi32>
    %5 = arith.andi %2, %4 : vector<1x256xi1>
    %cst = arith.constant 1.000000e+00 : f32
    %cst_0 = arith.constant 5.000000e-01 : f32
    %6 = vector.broadcast %cst : f32 to vector<1x256xf32>
    %7 = vector.broadcast %cst_0 : f32 to vector<1x256xf32>
    %8 = arith.select %5, %6, %7 : vector<1x256xi1>, vector<1x256xf32>
    %cst_1 = arith.constant 0.000000e+00 : f32
    %cst_2 = arith.constant 5.000000e-01 : f32
    %9 = vector.broadcast %cst_1 : f32 to vector<1x256xf32>
    %10 = vector.broadcast %cst_2 : f32 to vector<1x256xf32>
    %11 = arith.select %5, %9, %10 : vector<1x256xi1>, vector<1x256xf32>
    %c0 = arith.constant 0 : index
    %c0_3 = arith.constant 0 : index
    %12 = vector.load %arg0[%c0, %c0_3] : memref<72x32xf32, #tpu.memory_space<vmem>>, vector<72x32xf32>
    %c0_4 = arith.constant 0 : index
    %c0_5 = arith.constant 0 : index
    %13 = vector.load %arg1[%c0_4, %c0_5] : memref<32x256xf32, #tpu.memory_space<vmem>>, vector<32x256xf32>
    %cst_6 = arith.constant dense<0.000000e+00> : vector<72x256xf32>
    %14 = tpu.matmul %12, %13, %cst_6 {dimension_numbers = #tpu.dot_dimension_numbers<[1], [0], [0], [1], [0, 0, 1, 1], [], []>} : vector<72x32xf32>, vector<32x256xf32>, vector<72x256xf32> -> vector<72x256xf32>
    %c0_7 = arith.constant 0 : index
    %c0_8 = arith.constant 0 : index
    %15 = vector.load %arg2[%c0_7, %c0_8] : memref<64x256xf32, #tpu.memory_space<vmem>>, vector<64x256xf32>
    %cst_9 = arith.constant 0.000000e+00 : f32
    %16 = vector.broadcast %cst_9 : f32 to vector<8x64xf32>
    %17 = vector.extract_strided_slice %14 {offsets = [0, 0], sizes = [8, 256], strides = [1, 1]} : vector<72x256xf32> to vector<8x256xf32>
    %18 = math.tanh %17 : vector<8x256xf32>
    %19 = vector.broadcast %8 : vector<1x256xf32> to vector<8x256xf32>
    %20 = arith.mulf %18, %19 : vector<8x256xf32>
    %21 = vector.broadcast %11 : vector<1x256xf32> to vector<8x256xf32>
    %22 = arith.addf %20, %21 : vector<8x256xf32>
    %23 = vector.extract_strided_slice %22 {offsets = [0, 0], sizes = [8, 64], strides = [1, 1]} : vector<8x256xf32> to vector<8x64xf32>
    %24 = vector.extract_strided_slice %22 {offsets = [0, 64], sizes = [8, 64], strides = [1, 1]} : vector<8x256xf32> to vector<8x64xf32>
    %25 = vector.extract_strided_slice %22 {offsets = [0, 128], sizes = [8, 64], strides = [1, 1]} : vector<8x256xf32> to vector<8x64xf32>
    %26 = vector.extract_strided_slice %22 {offsets = [0, 192], sizes = [8, 64], strides = [1, 1]} : vector<8x256xf32> to vector<8x64xf32>
    %27 = arith.mulf %24, %16 : vector<8x64xf32>
    %28 = arith.mulf %23, %25 : vector<8x64xf32>
    %29 = arith.addf %27, %28 : vector<8x64xf32>
    %30 = math.tanh %29 : vector<8x64xf32>
    %31 = arith.mulf %26, %30 : vector<8x64xf32>
    %32 = vector.extract_strided_slice %14 {offsets = [8, 0], sizes = [8, 256], strides = [1, 1]} : vector<72x256xf32> to vector<8x256xf32>
    %cst_10 = arith.constant dense<0.000000e+00> : vector<8x256xf32>
    %33 = tpu.matmul %31, %15, %cst_10 {dimension_numbers = #tpu.dot_dimension_numbers<[1], [0], [0], [1], [0, 0, 1, 1], [], []>} : vector<8x64xf32>, vector<64x256xf32>, vector<8x256xf32> -> vector<8x256xf32>
    %34 = arith.addf %32, %33 : vector<8x256xf32>
    %35 = math.tanh %34 : vector<8x256xf32>
    %36 = vector.broadcast %8 : vector<1x256xf32> to vector<8x256xf32>
    %37 = arith.mulf %35, %36 : vector<8x256xf32>
    %38 = vector.broadcast %11 : vector<1x256xf32> to vector<8x256xf32>
    %39 = arith.addf %37, %38 : vector<8x256xf32>
    %40 = vector.extract_strided_slice %39 {offsets = [0, 0], sizes = [8, 64], strides = [1, 1]} : vector<8x256xf32> to vector<8x64xf32>
    %41 = vector.extract_strided_slice %39 {offsets = [0, 64], sizes = [8, 64], strides = [1, 1]} : vector<8x256xf32> to vector<8x64xf32>
    %42 = vector.extract_strided_slice %39 {offsets = [0, 128], sizes = [8, 64], strides = [1, 1]} : vector<8x256xf32> to vector<8x64xf32>
    %43 = vector.extract_strided_slice %39 {offsets = [0, 192], sizes = [8, 64], strides = [1, 1]} : vector<8x256xf32> to vector<8x64xf32>
    %44 = arith.mulf %41, %29 : vector<8x64xf32>
    %45 = arith.mulf %40, %42 : vector<8x64xf32>
    %46 = arith.addf %44, %45 : vector<8x64xf32>
    %47 = math.tanh %46 : vector<8x64xf32>
    %48 = arith.mulf %43, %47 : vector<8x64xf32>
    %49 = vector.extract_strided_slice %48 {offsets = [0, 32], sizes = [8, 32], strides = [1, 1]} : vector<8x64xf32> to vector<8x32xf32>
    %50 = vector.extract_strided_slice %14 {offsets = [16, 0], sizes = [8, 256], strides = [1, 1]} : vector<72x256xf32> to vector<8x256xf32>
    %cst_11 = arith.constant dense<0.000000e+00> : vector<8x256xf32>
    %51 = tpu.matmul %48, %15, %cst_11 {dimension_numbers = #tpu.dot_dimension_numbers<[1], [0], [0], [1], [0, 0, 1, 1], [], []>} : vector<8x64xf32>, vector<64x256xf32>, vector<8x256xf32> -> vector<8x256xf32>
    %52 = arith.addf %50, %51 : vector<8x256xf32>
    %53 = math.tanh %52 : vector<8x256xf32>
    %54 = vector.broadcast %8 : vector<1x256xf32> to vector<8x256xf32>
    %55 = arith.mulf %53, %54 : vector<8x256xf32>
    %56 = vector.broadcast %11 : vector<1x256xf32> to vector<8x256xf32>
    %57 = arith.addf %55, %56 : vector<8x256xf32>
    %58 = vector.extract_strided_slice %57 {offsets = [0, 0], sizes = [8, 64], strides = [1, 1]} : vector<8x256xf32> to vector<8x64xf32>
    %59 = vector.extract_strided_slice %57 {offsets = [0, 64], sizes = [8, 64], strides = [1, 1]} : vector<8x256xf32> to vector<8x64xf32>
    %60 = vector.extract_strided_slice %57 {offsets = [0, 128], sizes = [8, 64], strides = [1, 1]} : vector<8x256xf32> to vector<8x64xf32>
    %61 = vector.extract_strided_slice %57 {offsets = [0, 192], sizes = [8, 64], strides = [1, 1]} : vector<8x256xf32> to vector<8x64xf32>
    %62 = arith.mulf %59, %46 : vector<8x64xf32>
    %63 = arith.mulf %58, %60 : vector<8x64xf32>
    %64 = arith.addf %62, %63 : vector<8x64xf32>
    %65 = math.tanh %64 : vector<8x64xf32>
    %66 = arith.mulf %61, %65 : vector<8x64xf32>
    %67 = vector.extract_strided_slice %66 {offsets = [0, 32], sizes = [8, 32], strides = [1, 1]} : vector<8x64xf32> to vector<8x32xf32>
    %68 = vector.extract_strided_slice %14 {offsets = [24, 0], sizes = [8, 256], strides = [1, 1]} : vector<72x256xf32> to vector<8x256xf32>
    %cst_12 = arith.constant dense<0.000000e+00> : vector<8x256xf32>
    %69 = tpu.matmul %66, %15, %cst_12 {dimension_numbers = #tpu.dot_dimension_numbers<[1], [0], [0], [1], [0, 0, 1, 1], [], []>} : vector<8x64xf32>, vector<64x256xf32>, vector<8x256xf32> -> vector<8x256xf32>
    %70 = arith.addf %68, %69 : vector<8x256xf32>
    %71 = math.tanh %70 : vector<8x256xf32>
    %72 = vector.broadcast %8 : vector<1x256xf32> to vector<8x256xf32>
    %73 = arith.mulf %71, %72 : vector<8x256xf32>
    %74 = vector.broadcast %11 : vector<1x256xf32> to vector<8x256xf32>
    %75 = arith.addf %73, %74 : vector<8x256xf32>
    %76 = vector.extract_strided_slice %75 {offsets = [0, 0], sizes = [8, 64], strides = [1, 1]} : vector<8x256xf32> to vector<8x64xf32>
    %77 = vector.extract_strided_slice %75 {offsets = [0, 64], sizes = [8, 64], strides = [1, 1]} : vector<8x256xf32> to vector<8x64xf32>
    %78 = vector.extract_strided_slice %75 {offsets = [0, 128], sizes = [8, 64], strides = [1, 1]} : vector<8x256xf32> to vector<8x64xf32>
    %79 = vector.extract_strided_slice %75 {offsets = [0, 192], sizes = [8, 64], strides = [1, 1]} : vector<8x256xf32> to vector<8x64xf32>
    %80 = arith.mulf %77, %64 : vector<8x64xf32>
    %81 = arith.mulf %76, %78 : vector<8x64xf32>
    %82 = arith.addf %80, %81 : vector<8x64xf32>
    %83 = math.tanh %82 : vector<8x64xf32>
    %84 = arith.mulf %79, %83 : vector<8x64xf32>
    %85 = vector.extract_strided_slice %84 {offsets = [0, 32], sizes = [8, 32], strides = [1, 1]} : vector<8x64xf32> to vector<8x32xf32>
    %86 = vector.extract_strided_slice %14 {offsets = [32, 0], sizes = [8, 256], strides = [1, 1]} : vector<72x256xf32> to vector<8x256xf32>
    %cst_13 = arith.constant dense<0.000000e+00> : vector<8x256xf32>
    %87 = tpu.matmul %84, %15, %cst_13 {dimension_numbers = #tpu.dot_dimension_numbers<[1], [0], [0], [1], [0, 0, 1, 1], [], []>} : vector<8x64xf32>, vector<64x256xf32>, vector<8x256xf32> -> vector<8x256xf32>
    %88 = arith.addf %86, %87 : vector<8x256xf32>
    %89 = math.tanh %88 : vector<8x256xf32>
    %90 = vector.broadcast %8 : vector<1x256xf32> to vector<8x256xf32>
    %91 = arith.mulf %89, %90 : vector<8x256xf32>
    %92 = vector.broadcast %11 : vector<1x256xf32> to vector<8x256xf32>
    %93 = arith.addf %91, %92 : vector<8x256xf32>
    %94 = vector.extract_strided_slice %93 {offsets = [0, 0], sizes = [8, 64], strides = [1, 1]} : vector<8x256xf32> to vector<8x64xf32>
    %95 = vector.extract_strided_slice %93 {offsets = [0, 64], sizes = [8, 64], strides = [1, 1]} : vector<8x256xf32> to vector<8x64xf32>
    %96 = vector.extract_strided_slice %93 {offsets = [0, 128], sizes = [8, 64], strides = [1, 1]} : vector<8x256xf32> to vector<8x64xf32>
    %97 = vector.extract_strided_slice %93 {offsets = [0, 192], sizes = [8, 64], strides = [1, 1]} : vector<8x256xf32> to vector<8x64xf32>
    %98 = arith.mulf %95, %82 : vector<8x64xf32>
    %99 = arith.mulf %94, %96 : vector<8x64xf32>
    %100 = arith.addf %98, %99 : vector<8x64xf32>
    %101 = math.tanh %100 : vector<8x64xf32>
    %102 = arith.mulf %97, %101 : vector<8x64xf32>
    %103 = vector.extract_strided_slice %102 {offsets = [0, 32], sizes = [8, 32], strides = [1, 1]} : vector<8x64xf32> to vector<8x32xf32>
    %104 = vector.extract_strided_slice %14 {offsets = [40, 0], sizes = [8, 256], strides = [1, 1]} : vector<72x256xf32> to vector<8x256xf32>
    %cst_14 = arith.constant dense<0.000000e+00> : vector<8x256xf32>
    %105 = tpu.matmul %102, %15, %cst_14 {dimension_numbers = #tpu.dot_dimension_numbers<[1], [0], [0], [1], [0, 0, 1, 1], [], []>} : vector<8x64xf32>, vector<64x256xf32>, vector<8x256xf32> -> vector<8x256xf32>
    %106 = arith.addf %104, %105 : vector<8x256xf32>
    %107 = math.tanh %106 : vector<8x256xf32>
    %108 = vector.broadcast %8 : vector<1x256xf32> to vector<8x256xf32>
    %109 = arith.mulf %107, %108 : vector<8x256xf32>
    %110 = vector.broadcast %11 : vector<1x256xf32> to vector<8x256xf32>
    %111 = arith.addf %109, %110 : vector<8x256xf32>
    %112 = vector.extract_strided_slice %111 {offsets = [0, 0], sizes = [8, 64], strides = [1, 1]} : vector<8x256xf32> to vector<8x64xf32>
    %113 = vector.extract_strided_slice %111 {offsets = [0, 64], sizes = [8, 64], strides = [1, 1]} : vector<8x256xf32> to vector<8x64xf32>
    %114 = vector.extract_strided_slice %111 {offsets = [0, 128], sizes = [8, 64], strides = [1, 1]} : vector<8x256xf32> to vector<8x64xf32>
    %115 = vector.extract_strided_slice %111 {offsets = [0, 192], sizes = [8, 64], strides = [1, 1]} : vector<8x256xf32> to vector<8x64xf32>
    %116 = arith.mulf %113, %100 : vector<8x64xf32>
    %117 = arith.mulf %112, %114 : vector<8x64xf32>
    %118 = arith.addf %116, %117 : vector<8x64xf32>
    %119 = math.tanh %118 : vector<8x64xf32>
    %120 = arith.mulf %115, %119 : vector<8x64xf32>
    %121 = vector.extract_strided_slice %120 {offsets = [0, 32], sizes = [8, 32], strides = [1, 1]} : vector<8x64xf32> to vector<8x32xf32>
    %122 = vector.extract_strided_slice %14 {offsets = [48, 0], sizes = [8, 256], strides = [1, 1]} : vector<72x256xf32> to vector<8x256xf32>
    %cst_15 = arith.constant dense<0.000000e+00> : vector<8x256xf32>
    %123 = tpu.matmul %120, %15, %cst_15 {dimension_numbers = #tpu.dot_dimension_numbers<[1], [0], [0], [1], [0, 0, 1, 1], [], []>} : vector<8x64xf32>, vector<64x256xf32>, vector<8x256xf32> -> vector<8x256xf32>
    %124 = arith.addf %122, %123 : vector<8x256xf32>
    %125 = math.tanh %124 : vector<8x256xf32>
    %126 = vector.broadcast %8 : vector<1x256xf32> to vector<8x256xf32>
    %127 = arith.mulf %125, %126 : vector<8x256xf32>
    %128 = vector.broadcast %11 : vector<1x256xf32> to vector<8x256xf32>
    %129 = arith.addf %127, %128 : vector<8x256xf32>
    %130 = vector.extract_strided_slice %129 {offsets = [0, 0], sizes = [8, 64], strides = [1, 1]} : vector<8x256xf32> to vector<8x64xf32>
    %131 = vector.extract_strided_slice %129 {offsets = [0, 64], sizes = [8, 64], strides = [1, 1]} : vector<8x256xf32> to vector<8x64xf32>
    %132 = vector.extract_strided_slice %129 {offsets = [0, 128], sizes = [8, 64], strides = [1, 1]} : vector<8x256xf32> to vector<8x64xf32>
    %133 = vector.extract_strided_slice %129 {offsets = [0, 192], sizes = [8, 64], strides = [1, 1]} : vector<8x256xf32> to vector<8x64xf32>
    %134 = arith.mulf %131, %118 : vector<8x64xf32>
    %135 = arith.mulf %130, %132 : vector<8x64xf32>
    %136 = arith.addf %134, %135 : vector<8x64xf32>
    %137 = math.tanh %136 : vector<8x64xf32>
    %138 = arith.mulf %133, %137 : vector<8x64xf32>
    %139 = vector.extract_strided_slice %138 {offsets = [0, 32], sizes = [8, 32], strides = [1, 1]} : vector<8x64xf32> to vector<8x32xf32>
    %140 = vector.extract_strided_slice %14 {offsets = [56, 0], sizes = [8, 256], strides = [1, 1]} : vector<72x256xf32> to vector<8x256xf32>
    %cst_16 = arith.constant dense<0.000000e+00> : vector<8x256xf32>
    %141 = tpu.matmul %138, %15, %cst_16 {dimension_numbers = #tpu.dot_dimension_numbers<[1], [0], [0], [1], [0, 0, 1, 1], [], []>} : vector<8x64xf32>, vector<64x256xf32>, vector<8x256xf32> -> vector<8x256xf32>
    %142 = arith.addf %140, %141 : vector<8x256xf32>
    %143 = math.tanh %142 : vector<8x256xf32>
    %144 = vector.broadcast %8 : vector<1x256xf32> to vector<8x256xf32>
    %145 = arith.mulf %143, %144 : vector<8x256xf32>
    %146 = vector.broadcast %11 : vector<1x256xf32> to vector<8x256xf32>
    %147 = arith.addf %145, %146 : vector<8x256xf32>
    %148 = vector.extract_strided_slice %147 {offsets = [0, 0], sizes = [8, 64], strides = [1, 1]} : vector<8x256xf32> to vector<8x64xf32>
    %149 = vector.extract_strided_slice %147 {offsets = [0, 64], sizes = [8, 64], strides = [1, 1]} : vector<8x256xf32> to vector<8x64xf32>
    %150 = vector.extract_strided_slice %147 {offsets = [0, 128], sizes = [8, 64], strides = [1, 1]} : vector<8x256xf32> to vector<8x64xf32>
    %151 = vector.extract_strided_slice %147 {offsets = [0, 192], sizes = [8, 64], strides = [1, 1]} : vector<8x256xf32> to vector<8x64xf32>
    %152 = arith.mulf %149, %136 : vector<8x64xf32>
    %153 = arith.mulf %148, %150 : vector<8x64xf32>
    %154 = arith.addf %152, %153 : vector<8x64xf32>
    %155 = math.tanh %154 : vector<8x64xf32>
    %156 = arith.mulf %151, %155 : vector<8x64xf32>
    %157 = vector.extract_strided_slice %156 {offsets = [0, 32], sizes = [8, 32], strides = [1, 1]} : vector<8x64xf32> to vector<8x32xf32>
    %158 = vector.extract_strided_slice %14 {offsets = [64, 0], sizes = [8, 256], strides = [1, 1]} : vector<72x256xf32> to vector<8x256xf32>
    %cst_17 = arith.constant dense<0.000000e+00> : vector<8x256xf32>
    %159 = tpu.matmul %156, %15, %cst_17 {dimension_numbers = #tpu.dot_dimension_numbers<[1], [0], [0], [1], [0, 0, 1, 1], [], []>} : vector<8x64xf32>, vector<64x256xf32>, vector<8x256xf32> -> vector<8x256xf32>
    %160 = arith.addf %158, %159 : vector<8x256xf32>
    %161 = math.tanh %160 : vector<8x256xf32>
    %162 = vector.broadcast %8 : vector<1x256xf32> to vector<8x256xf32>
    %163 = arith.mulf %161, %162 : vector<8x256xf32>
    %164 = vector.broadcast %11 : vector<1x256xf32> to vector<8x256xf32>
    %165 = arith.addf %163, %164 : vector<8x256xf32>
    %166 = vector.extract_strided_slice %165 {offsets = [0, 0], sizes = [8, 64], strides = [1, 1]} : vector<8x256xf32> to vector<8x64xf32>
    %167 = vector.extract_strided_slice %165 {offsets = [0, 64], sizes = [8, 64], strides = [1, 1]} : vector<8x256xf32> to vector<8x64xf32>
    %168 = vector.extract_strided_slice %165 {offsets = [0, 128], sizes = [8, 64], strides = [1, 1]} : vector<8x256xf32> to vector<8x64xf32>
    %169 = vector.extract_strided_slice %165 {offsets = [0, 192], sizes = [8, 64], strides = [1, 1]} : vector<8x256xf32> to vector<8x64xf32>
    %170 = arith.mulf %167, %154 : vector<8x64xf32>
    %171 = arith.mulf %166, %168 : vector<8x64xf32>
    %172 = arith.addf %170, %171 : vector<8x64xf32>
    %173 = math.tanh %172 : vector<8x64xf32>
    %174 = arith.mulf %169, %173 : vector<8x64xf32>
    %175 = vector.extract_strided_slice %174 {offsets = [0, 32], sizes = [8, 32], strides = [1, 1]} : vector<8x64xf32> to vector<8x32xf32>
    %176 = tpu.concatenate %49, %67, %85, %103, %121, %139, %157, %175 in 1 : vector<8x32xf32>, vector<8x32xf32>, vector<8x32xf32>, vector<8x32xf32>, vector<8x32xf32>, vector<8x32xf32>, vector<8x32xf32>, vector<8x32xf32> -> vector<8x256xf32>
    %c0_18 = arith.constant 0 : index
    %c0_19 = arith.constant 0 : index
    %177 = vector.load %arg3[%c0_18, %c0_19] : memref<8x256xf32, #tpu.memory_space<vmem>>, vector<8x256xf32>
    tpu.vector_store %arg3[%c0_18, %c0_19], %176 {strides = array<i32>} : memref<8x256xf32, #tpu.memory_space<vmem>>, vector<8x256xf32>,
    return
  }
}

</mosaic_0001>

<llo_original>
// kernel: lstm_encoder.1
$region0: #{lstm_encoder.1}
  #allocation0 [shape = 'u32[]', space=smem, size = 0x4, offset = 0x4, fixed_abs, tag = 'smem constant byte address 0x4 - core index']
  #allocation1 [shape = 'u32[144,128]{1,0:T(1,128)}', space=vmem, size = 0x12000, scoped, tag = 'internal scratch']
  %s0 = inlined_call_operand.vmem [shape: f32[72,32], index: 0, kind: input, shape index: {}]
  %s1 = inlined_call_operand.vmem [shape: f32[32,256], index: 1, kind: input, shape index: {}]
  %s2 = inlined_call_operand.vmem [shape: f32[64,256], index: 2, kind: input, shape index: {}]
  %s3 = inlined_call_operand.vmem [shape: f32[8,256], index: 3, kind: output, shape index: {}]
  %s4 = sld [smem:[#allocation0]]
  $region22: #{lstm_encoder.1} parent=0
    _
  %s6 = ssub.s32 1, %s4
  %s7 = scalar_select 0, %s6, %s4
  // Predicated region
  $region2: #{lstm_encoder.1} parent=0 // pred_check
    _
  $region3: #{lstm_encoder.1} parent=0 // pred_check_branch
    %9 = sbr.rel (0) target = $region5
  $region4: #{lstm_encoder.1} parent=0 // pred_region
    _
  $region5: #{lstm_encoder.1} parent=0 // pred_fallthru
    _
  // Predicated region
  $region6: #{lstm_encoder.1} parent=0 // pred_check
    _
  $region7: #{lstm_encoder.1} parent=0 // pred_check_branch
    %11 = sbr.rel (0) target = $region9
  $region8: #{lstm_encoder.1} parent=0 // pred_region
    _
  $region9: #{lstm_encoder.1} parent=0 // pred_fallthru
    _
  // Predicated region
  $region10: #{lstm_encoder.1} parent=0 // pred_check
    _
  $region11: #{lstm_encoder.1} parent=0 // pred_check_branch
    %13 = sbr.rel (0) target = $region13
  $region12: #{lstm_encoder.1} parent=0 // pred_region
    _
  $region13: #{lstm_encoder.1} parent=0 // pred_fallthru
    _
  %v14 = vlaneseq
  %v15 = vand.u32 %v14, 127
  %v16 = vadd.s32 %v15, 128
  %vm17 = vcmp.ge.s32.totalorder %v15, 128
  %vm18 = vcmp.ge.s32.totalorder %v16, 128
  %vm19 = vcmp.lt.s32.totalorder %v15, 192
  %vm20 = vcmp.lt.s32.totalorder %v16, 192
  %vm21 = vmand %vm17, %vm19
  %vm22 = vmand %vm18, %vm20
  %v23 = vsel %vm21, 1.0, 0.5
  %v24 = vsel %vm22, 1.0, 0.5
  %v25 = vsel %vm21, 0.0, 0.5
  %v26 = vsel %vm22, 0.0, 0.5
  %v27 = vld [vmem:[%s0] sm:$0xff]
  %v28 = vld [vmem:[%s0 + $0x8] sm:$0xff]
  %v29 = vld [vmem:[%s0 + $0x10] sm:$0xff]
  %v30 = vld [vmem:[%s0 + $0x18] sm:$0xff]
  %v31 = vld [vmem:[%s0 + $0x20] sm:$0xff]
  %v32 = vld [vmem:[%s0 + $0x28] sm:$0xff]
  %v33 = vld [vmem:[%s0 + $0x30] sm:$0xff]
  %v34 = vld [vmem:[%s0 + $0x38] sm:$0xff]
  %v35 = vld [vmem:[%s0 + $0x40] sm:$0xff]
  %v36 = vld [vmem:[%s1] sm:$0xff]
  %v37 = vld [vmem:[%s1 + $0x8] sm:$0xff]
  %v38 = vld [vmem:[%s1 + $0x10] sm:$0xff]
  %v39 = vld [vmem:[%s1 + $0x18] sm:$0xff]
  %v40 = vld [vmem:[%s1 + $0x20] sm:$0xff]
  %v41 = vld [vmem:[%s1 + $0x28] sm:$0xff]
  %v42 = vld [vmem:[%s1 + $0x30] sm:$0xff]
  %v43 = vld [vmem:[%s1 + $0x38] sm:$0xff]
  %vm44 = vcmask 261120
  %v46 = vsel %vm44, %v27, 0
  %v49 = vsel %vm44, %v28, 0
  %v52 = vsel %vm44, %v29, 0
  %v55 = vsel %vm44, %v30, 0
  %v58 = vsel %vm44, %v31, 0
  %v61 = vsel %vm44, %v32, 0
  %v64 = vsel %vm44, %v33, 0
  %v67 = vsel %vm44, %v34, 0
  %v70 = vsel %vm44, %v35, 0
  %72 = vmatprep.subr.mxu0 %v37
  %73 = vmatpush1.msra.mxu0 %v36
  %74 = vmatprep.subr.mxu0 %v39
  %75 = vmatpush1.msra.mxu0 %v38
  %76 = vmatprep.subr.mxu0 %v41
  %77 = vmatpush1.msra.mxu0 %v40
  %78 = vmatprep.subr.mxu0 %v43
  %79 = vmatpush1.msra.mxu0 %v42
  %80 = vmatprep.subr.mxu0 0.0
  %81 = vmatpush1.msra.mxu0 0.0
  %82 = vmatprep.subr.mxu0 0.0
  %83 = vmatpush1.msra.mxu0 0.0
  %84 = vmatprep.subr.mxu0 0.0
  %85 = vmatpush1.msra.mxu0 0.0
  %86 = vmatprep.subr.mxu0 0.0
  %87 = vmatpush1.msra.mxu0 0.0
  %88 = vmatprep.subr.mxu0 0.0
  %89 = vmatpush1.msra.mxu0 0.0
  %90 = vmatprep.subr.mxu0 0.0
  %91 = vmatpush1.msra.mxu0 0.0
  %92 = vmatprep.subr.mxu0 0.0
  %93 = vmatpush1.msra.mxu0 0.0
  %94 = vmatprep.subr.mxu0 0.0
  %95 = vmatpush1.msra.mxu0 0.0
  %96 = vmatprep.subr.mxu0 0.0
  %97 = vmatpush1.msra.mxu0 0.0
  %98 = vmatprep.subr.mxu0 0.0
  %99 = vmatpush1.msra.mxu0 0.0
  %100 = vmatprep.subr.mxu0 0.0
  %101 = vmatpush1.msra.mxu0 0.0
  %102 = vmatprep.subr.mxu0 0.0
  %103 = vmatpush1.msra.mxu0 0.0
  %104 = vmatprep.subr.mxu0 0.0
  %105 = vmatpush1.msra.mxu0 0.0
  %106 = vmatprep.subr.mxu0 0.0
  %107 = vmatpush1.msra.mxu0 0.0
  %108 = vmatprep.subr.mxu0 0.0
  %109 = vmatpush1.msra.mxu0 0.0
  %110 = vmatprep.subr.mxu0 0.0
  %111 = vmatpush1.msra.mxu0 0.0
  %112 = vmatprep.subr.mxu0 0.0
  %113 = vmatpush1.msra.mxu0 0.0
  %114 = vmatprep.subr.mxu0 0.0
  %115 = vmatpush1.msra.mxu0 0.0
  %116 = vmatprep.subr.mxu0 0.0
  %117 = vmatpush1.msra.mxu0 0.0
  %118 = vmatprep.subr.mxu0 0.0
  %119 = vmatpush1.msra.mxu0 0.0
  %120 = vmatprep.subr.mxu0 0.0
  %121 = vmatpush1.msra.mxu0 0.0
  %122 = vmatprep.subr.mxu0 0.0
  %123 = vmatpush1.msra.mxu0 0.0
  %124 = vmatprep.subr.mxu0 0.0
  %125 = vmatpush1.msra.mxu0 0.0
  %126 = vmatprep.subr.mxu0 0.0
  %127 = vmatpush1.msra.mxu0 0.0
  %128 = vmatprep.subr.mxu0 0.0
  %129 = vmatpush1.msra.mxu0 0.0
  %130 = vmatprep.subr.mxu0 0.0
  %131 = vmatpush1.msra.mxu0 0.0
  %132 = vmatprep.subr.mxu0 0.0
  %133 = vmatpush1.msra.mxu0 0.0
  %134 = vmatprep.subr.mxu0 0.0
  %135 = vmatpush1.msra.mxu0 0.0
  %136 = vmatprep.mubr.f32.mxu0 0.0
  %137 = vmatmul.mubr.f32.gmra.mrb[0].mxu0 %v46
  %v138 = vpop.f32.mrb[0].mxu0
  %v139 = vadd.f32 0.0, %v138
  %v140 = vpop.f32.mrb[0].mxu0
  %v141 = vadd.f32 0.0, %v140
  %142 = vmatprep.mubr.f32.mxu0 0.0
  %143 = vmatmul.mubr.f32.gmra.mrb[0].mxu0 %v49
  %v144 = vpop.f32.mrb[0].mxu0
  %v145 = vadd.f32 0.0, %v144
  %v146 = vpop.f32.mrb[0].mxu0
  %v147 = vadd.f32 0.0, %v146
  %148 = vmatprep.mubr.f32.mxu0 0.0
  %149 = vmatmul.mubr.f32.gmra.mrb[0].mxu0 %v52
  %v150 = vpop.f32.mrb[0].mxu0
  %v151 = vadd.f32 0.0, %v150
  %v152 = vpop.f32.mrb[0].mxu0
  %v153 = vadd.f32 0.0, %v152
  %154 = vmatprep.mubr.f32.mxu0 0.0
  %155 = vmatmul.mubr.f32.gmra.mrb[0].mxu0 %v55
  %v156 = vpop.f32.mrb[0].mxu0
  %v157 = vadd.f32 0.0, %v156
  %v158 = vpop.f32.mrb[0].mxu0
  %v159 = vadd.f32 0.0, %v158
  %160 = vmatprep.mubr.f32.mxu0 0.0
  %161 = vmatmul.mubr.f32.gmra.mrb[0].mxu0 %v58
  %v162 = vpop.f32.mrb[0].mxu0
  %v163 = vadd.f32 0.0, %v162
  %v164 = vpop.f32.mrb[0].mxu0
  %v165 = vadd.f32 0.0, %v164
  %166 = vmatprep.mubr.f32.mxu0 0.0
  %167 = vmatmul.mubr.f32.gmra.mrb[0].mxu0 %v61
  %v168 = vpop.f32.mrb[0].mxu0
  %v169 = vadd.f32 0.0, %v168
  %v170 = vpop.f32.mrb[0].mxu0
  %v171 = vadd.f32 0.0, %v170
  %172 = vmatprep.mubr.f32.mxu0 0.0
  %173 = vmatmul.mubr.f32.gmra.mrb[0].mxu0 %v64
  %v174 = vpop.f32.mrb[0].mxu0
  %v175 = vadd.f32 0.0, %v174
  %v176 = vpop.f32.mrb[0].mxu0
  %v177 = vadd.f32 0.0, %v176
  %178 = vmatprep.mubr.f32.mxu0 0.0
  %179 = vmatmul.mubr.f32.gmra.mrb[0].mxu0 %v67
  %v180 = vpop.f32.mrb[0].mxu0
  %v181 = vadd.f32 0.0, %v180
  %v182 = vpop.f32.mrb[0].mxu0
  %v183 = vadd.f32 0.0, %v182
  %184 = vmatprep.mubr.f32.mxu0 0.0
  %185 = vmatmul.mubr.f32.gmra.mrb[0].mxu0 %v70
  %v186 = vpop.f32.mrb[0].mxu0
  %v187 = vadd.f32 0.0, %v186
  %v188 = vpop.f32.mrb[0].mxu0
  %v189 = vadd.f32 0.0, %v188
  %190 = vdwg.mxu0
  %v191 = vld [vmem:[%s2] sm:$0xff]
  %v192 = vld [vmem:[%s2 + $0x8] sm:$0xff]
  %v193 = vld [vmem:[%s2 + $0x10] sm:$0xff]
  %v194 = vld [vmem:[%s2 + $0x18] sm:$0xff]
  %v195 = vld [vmem:[%s2 + $0x20] sm:$0xff]
  %v196 = vld [vmem:[%s2 + $0x28] sm:$0xff]
  %v197 = vld [vmem:[%s2 + $0x30] sm:$0xff]
  %v198 = vld [vmem:[%s2 + $0x38] sm:$0xff]
  %v199 = vld [vmem:[%s2 + $0x40] sm:$0xff]
  %v200 = vld [vmem:[%s2 + $0x48] sm:$0xff]
  %v201 = vld [vmem:[%s2 + $0x50] sm:$0xff]
  %v202 = vld [vmem:[%s2 + $0x58] sm:$0xff]
  %v203 = vld [vmem:[%s2 + $0x60] sm:$0xff]
  %v204 = vld [vmem:[%s2 + $0x68] sm:$0xff]
  %v205 = vld [vmem:[%s2 + $0x70] sm:$0xff]
  %v206 = vld [vmem:[%s2 + $0x78] sm:$0xff]
  %v207 = vtanh.pop %v139
  %v208 = vtanh.pop %v141
  %v209 = vmul.f32 %v207, %v23
  %v210 = vmul.f32 %v208, %v24
  %v211 = vadd.f32 %v209, %v25
  %v212 = vadd.f32 %v210, %v26
  %v213 = vmul.f32 %v211, 0.0
  %v214 = vmul.f32 %v211, %v212
  %216 = vrot.lane.b32.xlu0 %v214, 64
  %v217 = vpop.permute.xlu0 %216
  %v219 = vadd.f32 %v213, %v217
  %v220 = vtanh.pop %v219
  %v221 = vmul.f32 %v212, %v220
  %223 = vrot.lane.b32.xlu0 %v221, 64
  %v224 = vpop.permute.xlu0 %223
  %vm225 = vcmask 523264
  %v226 = vsel %vm225, %v224, 0
  %228 = vmatprep.subr.mxu0 %v192
  %229 = vmatpush1.msra.mxu0 %v191
  %230 = vmatprep.subr.mxu0 %v194
  %231 = vmatpush1.msra.mxu0 %v193
  %232 = vmatprep.subr.mxu0 %v196
  %233 = vmatpush1.msra.mxu0 %v195
  %234 = vmatprep.subr.mxu0 %v198
  %235 = vmatpush1.msra.mxu0 %v197
  %236 = vmatprep.subr.mxu0 %v200
  %237 = vmatpush1.msra.mxu0 %v199
  %238 = vmatprep.subr.mxu0 %v202
  %239 = vmatpush1.msra.mxu0 %v201
  %240 = vmatprep.subr.mxu0 %v204
  %241 = vmatpush1.msra.mxu0 %v203
  %242 = vmatprep.subr.mxu0 %v206
  %243 = vmatpush1.msra.mxu0 %v205
  %244 = vmatprep.subr.mxu0 0.0
  %245 = vmatpush1.msra.mxu0 0.0
  %246 = vmatprep.subr.mxu0 0.0
  %247 = vmatpush1.msra.mxu0 0.0
  %248 = vmatprep.subr.mxu0 0.0
  %249 = vmatpush1.msra.mxu0 0.0
  %250 = vmatprep.subr.mxu0 0.0
  %251 = vmatpush1.msra.mxu0 0.0
  %252 = vmatprep.subr.mxu0 0.0
  %253 = vmatpush1.msra.mxu0 0.0
  %254 = vmatprep.subr.mxu0 0.0
  %255 = vmatpush1.msra.mxu0 0.0
  %256 = vmatprep.subr.mxu0 0.0
  %257 = vmatpush1.msra.mxu0 0.0
  %258 = vmatprep.subr.mxu0 0.0
  %259 = vmatpush1.msra.mxu0 0.0
  %260 = vmatprep.subr.mxu0 0.0
  %261 = vmatpush1.msra.mxu0 0.0
  %262 = vmatprep.subr.mxu0 0.0
  %263 = vmatpush1.msra.mxu0 0.0
  %264 = vmatprep.subr.mxu0 0.0
  %265 = vmatpush1.msra.mxu0 0.0
  %266 = vmatprep.subr.mxu0 0.0
  %267 = vmatpush1.msra.mxu0 0.0
  %268 = vmatprep.subr.mxu0 0.0
  %269 = vmatpush1.msra.mxu0 0.0
  %270 = vmatprep.subr.mxu0 0.0
  %271 = vmatpush1.msra.mxu0 0.0
  %272 = vmatprep.subr.mxu0 0.0
  %273 = vmatpush1.msra.mxu0 0.0
  %274 = vmatprep.subr.mxu0 0.0
  %275 = vmatpush1.msra.mxu0 0.0
  %276 = vmatprep.subr.mxu0 0.0
  %277 = vmatpush1.msra.mxu0 0.0
  %278 = vmatprep.subr.mxu0 0.0
  %279 = vmatpush1.msra.mxu0 0.0
  %280 = vmatprep.subr.mxu0 0.0
  %281 = vmatpush1.msra.mxu0 0.0
  %282 = vmatprep.subr.mxu0 0.0
  %283 = vmatpush1.msra.mxu0 0.0
  %284 = vmatprep.subr.mxu0 0.0
  %285 = vmatpush1.msra.mxu0 0.0
  %286 = vmatprep.subr.mxu0 0.0
  %287 = vmatpush1.msra.mxu0 0.0
  %288 = vmatprep.subr.mxu0 0.0
  %289 = vmatpush1.msra.mxu0 0.0
  %290 = vmatprep.subr.mxu0 0.0
  %291 = vmatpush1.msra.mxu0 0.0
  %292 = vmatprep.mubr.f32.mxu0 0.0
  %293 = vmatmul.mubr.f32.gmra.mrb[0].mxu0 %v226
  %v294 = vpop.f32.mrb[0].mxu0
  %v295 = vadd.f32 0.0, %v294
  %v296 = vpop.f32.mrb[0].mxu0
  %v297 = vadd.f32 0.0, %v296
  %298 = vdwg.mxu0
  %v299 = vadd.f32 %v145, %v295
  %v300 = vadd.f32 %v147, %v297
  %v301 = vtanh.pop %v299
  %v302 = vtanh.pop %v300
  %v303 = vmul.f32 %v301, %v23
  %v304 = vmul.f32 %v302, %v24
  %v305 = vadd.f32 %v303, %v25
  %v306 = vadd.f32 %v304, %v26
  %v307 = vmul.f32 %v305, %v219
  %v308 = vmul.f32 %v305, %v306
  %310 = vrot.lane.b32.xlu0 %v308, 64
  %v311 = vpop.permute.xlu0 %310
  %v313 = vadd.f32 %v307, %v311
  %v314 = vtanh.pop %v313
  %v315 = vmul.f32 %v306, %v314
  %317 = vrot.lane.b32.xlu0 %v315, 64
  %v318 = vpop.permute.xlu0 %317
  %v319 = vsel %vm225, %v318, 0
  %321 = vmatprep.subr.mxu0 %v192
  %322 = vmatpush1.msra.mxu0 %v191
  %323 = vmatprep.subr.mxu0 %v194
  %324 = vmatpush1.msra.mxu0 %v193
  %325 = vmatprep.subr.mxu0 %v196
  %326 = vmatpush1.msra.mxu0 %v195
  %327 = vmatprep.subr.mxu0 %v198
  %328 = vmatpush1.msra.mxu0 %v197
  %329 = vmatprep.subr.mxu0 %v200
  %330 = vmatpush1.msra.mxu0 %v199
  %331 = vmatprep.subr.mxu0 %v202
  %332 = vmatpush1.msra.mxu0 %v201
  %333 = vmatprep.subr.mxu0 %v204
  %334 = vmatpush1.msra.mxu0 %v203
  %335 = vmatprep.subr.mxu0 %v206
  %336 = vmatpush1.msra.mxu0 %v205
  %337 = vmatprep.subr.mxu0 0.0
  %338 = vmatpush1.msra.mxu0 0.0
  %339 = vmatprep.subr.mxu0 0.0
  %340 = vmatpush1.msra.mxu0 0.0
  %341 = vmatprep.subr.mxu0 0.0
  %342 = vmatpush1.msra.mxu0 0.0
  %343 = vmatprep.subr.mxu0 0.0
  %344 = vmatpush1.msra.mxu0 0.0
  %345 = vmatprep.subr.mxu0 0.0
  %346 = vmatpush1.msra.mxu0 0.0
  %347 = vmatprep.subr.mxu0 0.0
  %348 = vmatpush1.msra.mxu0 0.0
  %349 = vmatprep.subr.mxu0 0.0
  %350 = vmatpush1.msra.mxu0 0.0
  %351 = vmatprep.subr.mxu0 0.0
  %352 = vmatpush1.msra.mxu0 0.0
  %353 = vmatprep.subr.mxu0 0.0
  %354 = vmatpush1.msra.mxu0 0.0
  %355 = vmatprep.subr.mxu0 0.0
  %356 = vmatpush1.msra.mxu0 0.0
  %357 = vmatprep.subr.mxu0 0.0
  %358 = vmatpush1.msra.mxu0 0.0
  %359 = vmatprep.subr.mxu0 0.0
  %360 = vmatpush1.msra.mxu0 0.0
  %361 = vmatprep.subr.mxu0 0.0
  %362 = vmatpush1.msra.mxu0 0.0
  %363 = vmatprep.subr.mxu0 0.0
  %364 = vmatpush1.msra.mxu0 0.0
  %365 = vmatprep.subr.mxu0 0.0
  %366 = vmatpush1.msra.mxu0 0.0
  %367 = vmatprep.subr.mxu0 0.0
  %368 = vmatpush1.msra.mxu0 0.0
  %369 = vmatprep.subr.mxu0 0.0
  %370 = vmatpush1.msra.mxu0 0.0
  %371 = vmatprep.subr.mxu0 0.0
  %372 = vmatpush1.msra.mxu0 0.0
  %373 = vmatprep.subr.mxu0 0.0
  %374 = vmatpush1.msra.mxu0 0.0
  %375 = vmatprep.subr.mxu0 0.0
  %376 = vmatpush1.msra.mxu0 0.0
  %377 = vmatprep.subr.mxu0 0.0
  %378 = vmatpush1.msra.mxu0 0.0
  %379 = vmatprep.subr.mxu0 0.0
  %380 = vmatpush1.msra.mxu0 0.0
  %381 = vmatprep.subr.mxu0 0.0
  %382 = vmatpush1.msra.mxu0 0.0
  %383 = vmatprep.subr.mxu0 0.0
  %384 = vmatpush1.msra.mxu0 0.0
  %385 = vmatprep.mubr.f32.mxu0 0.0
  %386 = vmatmul.mubr.f32.gmra.mrb[0].mxu0 %v319
  %v387 = vpop.f32.mrb[0].mxu0
  %v388 = vadd.f32 0.0, %v387
  %v389 = vpop.f32.mrb[0].mxu0
  %v390 = vadd.f32 0.0, %v389
  %391 = vdwg.mxu0
  %v392 = vadd.f32 %v151, %v388
  %v393 = vadd.f32 %v153, %v390
  %v394 = vtanh.pop %v392
  %v395 = vtanh.pop %v393
  %v396 = vmul.f32 %v394, %v23
  %v397 = vmul.f32 %v395, %v24
  %v398 = vadd.f32 %v396, %v25
  %v399 = vadd.f32 %v397, %v26
  %v400 = vmul.f32 %v398, %v313
  %v401 = vmul.f32 %v398, %v399
  %403 = vrot.lane.b32.xlu0 %v401, 64
  %v404 = vpop.permute.xlu0 %403
  %v406 = vadd.f32 %v400, %v404
  %v407 = vtanh.pop %v406
  %v408 = vmul.f32 %v399, %v407
  %410 = vrot.lane.b32.xlu0 %v408, 64
  %v411 = vpop.permute.xlu0 %410
  %v412 = vsel %vm225, %v411, 0
  %414 = vmatprep.subr.mxu0 %v192
  %415 = vmatpush1.msra.mxu0 %v191
  %416 = vmatprep.subr.mxu0 %v194
  %417 = vmatpush1.msra.mxu0 %v193
  %418 = vmatprep.subr.mxu0 %v196
  %419 = vmatpush1.msra.mxu0 %v195
  %420 = vmatprep.subr.mxu0 %v198
  %421 = vmatpush1.msra.mxu0 %v197
  %422 = vmatprep.subr.mxu0 %v200
  %423 = vmatpush1.msra.mxu0 %v199
  %424 = vmatprep.subr.mxu0 %v202
  %425 = vmatpush1.msra.mxu0 %v201
  %426 = vmatprep.subr.mxu0 %v204
  %427 = vmatpush1.msra.mxu0 %v203
  %428 = vmatprep.subr.mxu0 %v206
  %429 = vmatpush1.msra.mxu0 %v205
  %430 = vmatprep.subr.mxu0 0.0
  %431 = vmatpush1.msra.mxu0 0.0
  %432 = vmatprep.subr.mxu0 0.0
  %433 = vmatpush1.msra.mxu0 0.0
  %434 = vmatprep.subr.mxu0 0.0
  %435 = vmatpush1.msra.mxu0 0.0
  %436 = vmatprep.subr.mxu0 0.0
  %437 = vmatpush1.msra.mxu0 0.0
  %438 = vmatprep.subr.mxu0 0.0
  %439 = vmatpush1.msra.mxu0 0.0
  %440 = vmatprep.subr.mxu0 0.0
  %441 = vmatpush1.msra.mxu0 0.0
  %442 = vmatprep.subr.mxu0 0.0
  %443 = vmatpush1.msra.mxu0 0.0
  %444 = vmatprep.subr.mxu0 0.0
  %445 = vmatpush1.msra.mxu0 0.0
  %446 = vmatprep.subr.mxu0 0.0
  %447 = vmatpush1.msra.mxu0 0.0
  %448 = vmatprep.subr.mxu0 0.0
  %449 = vmatpush1.msra.mxu0 0.0
  %450 = vmatprep.subr.mxu0 0.0
  %451 = vmatpush1.msra.mxu0 0.0
  %452 = vmatprep.subr.mxu0 0.0
  %453 = vmatpush1.msra.mxu0 0.0
  %454 = vmatprep.subr.mxu0 0.0
  %455 = vmatpush1.msra.mxu0 0.0
  %456 = vmatprep.subr.mxu0 0.0
  %457 = vmatpush1.msra.mxu0 0.0
  %458 = vmatprep.subr.mxu0 0.0
  %459 = vmatpush1.msra.mxu0 0.0
  %460 = vmatprep.subr.mxu0 0.0
  %461 = vmatpush1.msra.mxu0 0.0
  %462 = vmatprep.subr.mxu0 0.0
  %463 = vmatpush1.msra.mxu0 0.0
  %464 = vmatprep.subr.mxu0 0.0
  %465 = vmatpush1.msra.mxu0 0.0
  %466 = vmatprep.subr.mxu0 0.0
  %467 = vmatpush1.msra.mxu0 0.0
  %468 = vmatprep.subr.mxu0 0.0
  %469 = vmatpush1.msra.mxu0 0.0
  %470 = vmatprep.subr.mxu0 0.0
  %471 = vmatpush1.msra.mxu0 0.0
  %472 = vmatprep.subr.mxu0 0.0
  %473 = vmatpush1.msra.mxu0 0.0
  %474 = vmatprep.subr.mxu0 0.0
  %475 = vmatpush1.msra.mxu0 0.0
  %476 = vmatprep.subr.mxu0 0.0
  %477 = vmatpush1.msra.mxu0 0.0
  %478 = vmatprep.mubr.f32.mxu0 0.0
  %479 = vmatmul.mubr.f32.gmra.mrb[0].mxu0 %v412
  %v480 = vpop.f32.mrb[0].mxu0
  %v481 = vadd.f32 0.0, %v480
  %v482 = vpop.f32.mrb[0].mxu0
  %v483 = vadd.f32 0.0, %v482
  %484 = vdwg.mxu0
  %v485 = vadd.f32 %v157, %v481
  %v486 = vadd.f32 %v159, %v483
  %v487 = vtanh.pop %v485
  %v488 = vtanh.pop %v486
  %v489 = vmul.f32 %v487, %v23
  %v490 = vmul.f32 %v488, %v24
  %v491 = vadd.f32 %v489, %v25
  %v492 = vadd.f32 %v490, %v26
  %v493 = vmul.f32 %v491, %v406
  %v494 = vmul.f32 %v491, %v492
  %496 = vrot.lane.b32.xlu0 %v494, 64
  %v497 = vpop.permute.xlu0 %496
  %v499 = vadd.f32 %v493, %v497
  %v500 = vtanh.pop %v499
  %v501 = vmul.f32 %v492, %v500
  %503 = vrot.lane.b32.xlu0 %v501, 64
  %v504 = vpop.permute.xlu0 %503
  %v505 = vsel %vm225, %v504, 0
  %507 = vmatprep.subr.mxu0 %v192
  %508 = vmatpush1.msra.mxu0 %v191
  %509 = vmatprep.subr.mxu0 %v194
  %510 = vmatpush1.msra.mxu0 %v193
  %511 = vmatprep.subr.mxu0 %v196
  %512 = vmatpush1.msra.mxu0 %v195
  %513 = vmatprep.subr.mxu0 %v198
  %514 = vmatpush1.msra.mxu0 %v197
  %515 = vmatprep.subr.mxu0 %v200
  %516 = vmatpush1.msra.mxu0 %v199
  %517 = vmatprep.subr.mxu0 %v202
  %518 = vmatpush1.msra.mxu0 %v201
  %519 = vmatprep.subr.mxu0 %v204
  %520 = vmatpush1.msra.mxu0 %v203
  %521 = vmatprep.subr.mxu0 %v206
  %522 = vmatpush1.msra.mxu0 %v205
  %523 = vmatprep.subr.mxu0 0.0
  %524 = vmatpush1.msra.mxu0 0.0
  %525 = vmatprep.subr.mxu0 0.0
  %526 = vmatpush1.msra.mxu0 0.0
  %527 = vmatprep.subr.mxu0 0.0
  %528 = vmatpush1.msra.mxu0 0.0
  %529 = vmatprep.subr.mxu0 0.0
  %530 = vmatpush1.msra.mxu0 0.0
  %531 = vmatprep.subr.mxu0 0.0
  %532 = vmatpush1.msra.mxu0 0.0
  %533 = vmatprep.subr.mxu0 0.0
  %534 = vmatpush1.msra.mxu0 0.0
  %535 = vmatprep.subr.mxu0 0.0
  %536 = vmatpush1.msra.mxu0 0.0
  %537 = vmatprep.subr.mxu0 0.0
  %538 = vmatpush1.msra.mxu0 0.0
  %539 = vmatprep.subr.mxu0 0.0
  %540 = vmatpush1.msra.mxu0 0.0
  %541 = vmatprep.subr.mxu0 0.0
  %542 = vmatpush1.msra.mxu0 0.0
  %543 = vmatprep.subr.mxu0 0.0
  %544 = vmatpush1.msra.mxu0 0.0
  %545 = vmatprep.subr.mxu0 0.0
  %546 = vmatpush1.msra.mxu0 0.0
  %547 = vmatprep.subr.mxu0 0.0
  %548 = vmatpush1.msra.mxu0 0.0
  %549 = vmatprep.subr.mxu0 0.0
  %550 = vmatpush1.msra.mxu0 0.0
  %551 = vmatprep.subr.mxu0 0.0
  %552 = vmatpush1.msra.mxu0 0.0
  %553 = vmatprep.subr.mxu0 0.0
  %554 = vmatpush1.msra.mxu0 0.0
  %555 = vmatprep.subr.mxu0 0.0
  %556 = vmatpush1.msra.mxu0 0.0
  %557 = vmatprep.subr.mxu0 0.0
  %558 = vmatpush1.msra.mxu0 0.0
  %559 = vmatprep.subr.mxu0 0.0
  %560 = vmatpush1.msra.mxu0 0.0
  %561 = vmatprep.subr.mxu0 0.0
  %562 = vmatpush1.msra.mxu0 0.0
  %563 = vmatprep.subr.mxu0 0.0
  %564 = vmatpush1.msra.mxu0 0.0
  %565 = vmatprep.subr.mxu0 0.0
  %566 = vmatpush1.msra.mxu0 0.0
  %567 = vmatprep.subr.mxu0 0.0
  %568 = vmatpush1.msra.mxu0 0.0
  %569 = vmatprep.subr.mxu0 0.0
  %570 = vmatpush1.msra.mxu0 0.0
  %571 = vmatprep.mubr.f32.mxu0 0.0
  %572 = vmatmul.mubr.f32.gmra.mrb[0].mxu0 %v505
  %v573 = vpop.f32.mrb[0].mxu0
  %v574 = vadd.f32 0.0, %v573
  %v575 = vpop.f32.mrb[0].mxu0
  %v576 = vadd.f32 0.0, %v575
  %577 = vdwg.mxu0
  %v578 = vadd.f32 %v163, %v574
  %v579 = vadd.f32 %v165, %v576
  %v580 = vtanh.pop %v578
  %v581 = vtanh.pop %v579
  %v582 = vmul.f32 %v580, %v23
  %v583 = vmul.f32 %v581, %v24
  %v584 = vadd.f32 %v582, %v25
  %v585 = vadd.f32 %v583, %v26
  %v586 = vmul.f32 %v584, %v499
  %v587 = vmul.f32 %v584, %v585
  %589 = vrot.lane.b32.xlu0 %v587, 64
  %v590 = vpop.permute.xlu0 %589
  %v592 = vadd.f32 %v586, %v590
  %v593 = vtanh.pop %v592
  %v594 = vmul.f32 %v585, %v593
  %596 = vrot.lane.b32.xlu0 %v594, 64
  %v597 = vpop.permute.xlu0 %596
  %v598 = vsel %vm225, %v597, 0
  %600 = vmatprep.subr.mxu0 %v192
  %601 = vmatpush1.msra.mxu0 %v191
  %602 = vmatprep.subr.mxu0 %v194
  %603 = vmatpush1.msra.mxu0 %v193
  %604 = vmatprep.subr.mxu0 %v196
  %605 = vmatpush1.msra.mxu0 %v195
  %606 = vmatprep.subr.mxu0 %v198
  %607 = vmatpush1.msra.mxu0 %v197
  %608 = vmatprep.subr.mxu0 %v200
  %609 = vmatpush1.msra.mxu0 %v199
  %610 = vmatprep.subr.mxu0 %v202
  %611 = vmatpush1.msra.mxu0 %v201
  %612 = vmatprep.subr.mxu0 %v204
  %613 = vmatpush1.msra.mxu0 %v203
  %614 = vmatprep.subr.mxu0 %v206
  %615 = vmatpush1.msra.mxu0 %v205
  %616 = vmatprep.subr.mxu0 0.0
  %617 = vmatpush1.msra.mxu0 0.0
  %618 = vmatprep.subr.mxu0 0.0
  %619 = vmatpush1.msra.mxu0 0.0
  %620 = vmatprep.subr.mxu0 0.0
  %621 = vmatpush1.msra.mxu0 0.0
  %622 = vmatprep.subr.mxu0 0.0
  %623 = vmatpush1.msra.mxu0 0.0
  %624 = vmatprep.subr.mxu0 0.0
  %625 = vmatpush1.msra.mxu0 0.0
  %626 = vmatprep.subr.mxu0 0.0
  %627 = vmatpush1.msra.mxu0 0.0
  %628 = vmatprep.subr.mxu0 0.0
  %629 = vmatpush1.msra.mxu0 0.0
  %630 = vmatprep.subr.mxu0 0.0
  %631 = vmatpush1.msra.mxu0 0.0
  %632 = vmatprep.subr.mxu0 0.0
  %633 = vmatpush1.msra.mxu0 0.0
  %634 = vmatprep.subr.mxu0 0.0
  %635 = vmatpush1.msra.mxu0 0.0
  %636 = vmatprep.subr.mxu0 0.0
  %637 = vmatpush1.msra.mxu0 0.0
  %638 = vmatprep.subr.mxu0 0.0
  %639 = vmatpush1.msra.mxu0 0.0
  %640 = vmatprep.subr.mxu0 0.0
  %641 = vmatpush1.msra.mxu0 0.0
  %642 = vmatprep.subr.mxu0 0.0
  %643 = vmatpush1.msra.mxu0 0.0
  %644 = vmatprep.subr.mxu0 0.0
  %645 = vmatpush1.msra.mxu0 0.0
  %646 = vmatprep.subr.mxu0 0.0
  %647 = vmatpush1.msra.mxu0 0.0
  %648 = vmatprep.subr.mxu0 0.0
  %649 = vmatpush1.msra.mxu0 0.0
  %650 = vmatprep.subr.mxu0 0.0
  %651 = vmatpush1.msra.mxu0 0.0
  %652 = vmatprep.subr.mxu0 0.0
  %653 = vmatpush1.msra.mxu0 0.0
  %654 = vmatprep.subr.mxu0 0.0
  %655 = vmatpush1.msra.mxu0 0.0
  %656 = vmatprep.subr.mxu0 0.0
  %657 = vmatpush1.msra.mxu0 0.0
  %658 = vmatprep.subr.mxu0 0.0
  %659 = vmatpush1.msra.mxu0 0.0
  %660 = vmatprep.subr.mxu0 0.0
  %661 = vmatpush1.msra.mxu0 0.0
  %662 = vmatprep.subr.mxu0 0.0
  %663 = vmatpush1.msra.mxu0 0.0
  %664 = vmatprep.mubr.f32.mxu0 0.0
  %665 = vmatmul.mubr.f32.gmra.mrb[0].mxu0 %v598
  %v666 = vpop.f32.mrb[0].mxu0
  %v667 = vadd.f32 0.0, %v666
  %v668 = vpop.f32.mrb[0].mxu0
  %v669 = vadd.f32 0.0, %v668
  %670 = vdwg.mxu0
  %v671 = vadd.f32 %v169, %v667
  %v672 = vadd.f32 %v171, %v669
  %v673 = vtanh.pop %v671
  %v674 = vtanh.pop %v672
  %v675 = vmul.f32 %v673, %v23
  %v676 = vmul.f32 %v674, %v24
  %v677 = vadd.f32 %v675, %v25
  %v678 = vadd.f32 %v676, %v26
  %v679 = vmul.f32 %v677, %v592
  %v680 = vmul.f32 %v677, %v678
  %682 = vrot.lane.b32.xlu0 %v680, 64
  %v683 = vpop.permute.xlu0 %682
  %v685 = vadd.f32 %v679, %v683
  %v686 = vtanh.pop %v685
  %v687 = vmul.f32 %v678, %v686
  %689 = vrot.lane.b32.xlu0 %v687, 64
  %v690 = vpop.permute.xlu0 %689
  %v691 = vsel %vm225, %v690, 0
  %693 = vmatprep.subr.mxu0 %v192
  %694 = vmatpush1.msra.mxu0 %v191
  %695 = vmatprep.subr.mxu0 %v194
  %696 = vmatpush1.msra.mxu0 %v193
  %697 = vmatprep.subr.mxu0 %v196
  %698 = vmatpush1.msra.mxu0 %v195
  %699 = vmatprep.subr.mxu0 %v198
  %700 = vmatpush1.msra.mxu0 %v197
  %701 = vmatprep.subr.mxu0 %v200
  %702 = vmatpush1.msra.mxu0 %v199
  %703 = vmatprep.subr.mxu0 %v202
  %704 = vmatpush1.msra.mxu0 %v201
  %705 = vmatprep.subr.mxu0 %v204
  %706 = vmatpush1.msra.mxu0 %v203
  %707 = vmatprep.subr.mxu0 %v206
  %708 = vmatpush1.msra.mxu0 %v205
  %709 = vmatprep.subr.mxu0 0.0
  %710 = vmatpush1.msra.mxu0 0.0
  %711 = vmatprep.subr.mxu0 0.0
  %712 = vmatpush1.msra.mxu0 0.0
  %713 = vmatprep.subr.mxu0 0.0
  %714 = vmatpush1.msra.mxu0 0.0
  %715 = vmatprep.subr.mxu0 0.0
  %716 = vmatpush1.msra.mxu0 0.0
  %717 = vmatprep.subr.mxu0 0.0
  %718 = vmatpush1.msra.mxu0 0.0
  %719 = vmatprep.subr.mxu0 0.0
  %720 = vmatpush1.msra.mxu0 0.0
  %721 = vmatprep.subr.mxu0 0.0
  %722 = vmatpush1.msra.mxu0 0.0
  %723 = vmatprep.subr.mxu0 0.0
  %724 = vmatpush1.msra.mxu0 0.0
  %725 = vmatprep.subr.mxu0 0.0
  %726 = vmatpush1.msra.mxu0 0.0
  %727 = vmatprep.subr.mxu0 0.0
  %728 = vmatpush1.msra.mxu0 0.0
  %729 = vmatprep.subr.mxu0 0.0
  %730 = vmatpush1.msra.mxu0 0.0
  %731 = vmatprep.subr.mxu0 0.0
  %732 = vmatpush1.msra.mxu0 0.0
  %733 = vmatprep.subr.mxu0 0.0
  %734 = vmatpush1.msra.mxu0 0.0
  %735 = vmatprep.subr.mxu0 0.0
  %736 = vmatpush1.msra.mxu0 0.0
  %737 = vmatprep.subr.mxu0 0.0
  %738 = vmatpush1.msra.mxu0 0.0
  %739 = vmatprep.subr.mxu0 0.0
  %740 = vmatpush1.msra.mxu0 0.0
  %741 = vmatprep.subr.mxu0 0.0
  %742 = vmatpush1.msra.mxu0 0.0
  %743 = vmatprep.subr.mxu0 0.0
  %744 = vmatpush1.msra.mxu0 0.0
  %745 = vmatprep.subr.mxu0 0.0
  %746 = vmatpush1.msra.mxu0 0.0
  %747 = vmatprep.subr.mxu0 0.0
  %748 = vmatpush1.msra.mxu0 0.0
  %749 = vmatprep.subr.mxu0 0.0
  %750 = vmatpush1.msra.mxu0 0.0
  %751 = vmatprep.subr.mxu0 0.0
  %752 = vmatpush1.msra.mxu0 0.0
  %753 = vmatprep.subr.mxu0 0.0
  %754 = vmatpush1.msra.mxu0 0.0
  %755 = vmatprep.subr.mxu0 0.0
  %756 = vmatpush1.msra.mxu0 0.0
  %757 = vmatprep.mubr.f32.mxu0 0.0
  %758 = vmatmul.mubr.f32.gmra.mrb[0].mxu0 %v691
  %v759 = vpop.f32.mrb[0].mxu0
  %v760 = vadd.f32 0.0, %v759
  %v761 = vpop.f32.mrb[0].mxu0
  %v762 = vadd.f32 0.0, %v761
  %763 = vdwg.mxu0
  %v764 = vadd.f32 %v175, %v760
  %v765 = vadd.f32 %v177, %v762
  %v766 = vtanh.pop %v764
  %v767 = vtanh.pop %v765
  %v768 = vmul.f32 %v766, %v23
  %v769 = vmul.f32 %v767, %v24
  %v770 = vadd.f32 %v768, %v25
  %v771 = vadd.f32 %v769, %v26
  %v772 = vmul.f32 %v770, %v685
  %v773 = vmul.f32 %v770, %v771
  %775 = vrot.lane.b32.xlu0 %v773, 64
  %v776 = vpop.permute.xlu0 %775
  %v778 = vadd.f32 %v772, %v776
  %v779 = vtanh.pop %v778
  %v780 = vmul.f32 %v771, %v779
  %782 = vrot.lane.b32.xlu0 %v780, 64
  %v783 = vpop.permute.xlu0 %782
  %v784 = vsel %vm225, %v783, 0
  %786 = vmatprep.subr.mxu0 %v192
  %787 = vmatpush1.msra.mxu0 %v191
  %788 = vmatprep.subr.mxu0 %v194
  %789 = vmatpush1.msra.mxu0 %v193
  %790 = vmatprep.subr.mxu0 %v196
  %791 = vmatpush1.msra.mxu0 %v195
  %792 = vmatprep.subr.mxu0 %v198
  %793 = vmatpush1.msra.mxu0 %v197
  %794 = vmatprep.subr.mxu0 %v200
  %795 = vmatpush1.msra.mxu0 %v199
  %796 = vmatprep.subr.mxu0 %v202
  %797 = vmatpush1.msra.mxu0 %v201
  %798 = vmatprep.subr.mxu0 %v204
  %799 = vmatpush1.msra.mxu0 %v203
  %800 = vmatprep.subr.mxu0 %v206
  %801 = vmatpush1.msra.mxu0 %v205
  %802 = vmatprep.subr.mxu0 0.0
  %803 = vmatpush1.msra.mxu0 0.0
  %804 = vmatprep.subr.mxu0 0.0
  %805 = vmatpush1.msra.mxu0 0.0
  %806 = vmatprep.subr.mxu0 0.0
  %807 = vmatpush1.msra.mxu0 0.0
  %808 = vmatprep.subr.mxu0 0.0
  %809 = vmatpush1.msra.mxu0 0.0
  %810 = vmatprep.subr.mxu0 0.0
  %811 = vmatpush1.msra.mxu0 0.0
  %812 = vmatprep.subr.mxu0 0.0
  %813 = vmatpush1.msra.mxu0 0.0
  %814 = vmatprep.subr.mxu0 0.0
  %815 = vmatpush1.msra.mxu0 0.0
  %816 = vmatprep.subr.mxu0 0.0
  %817 = vmatpush1.msra.mxu0 0.0
  %818 = vmatprep.subr.mxu0 0.0
  %819 = vmatpush1.msra.mxu0 0.0
  %820 = vmatprep.subr.mxu0 0.0
  %821 = vmatpush1.msra.mxu0 0.0
  %822 = vmatprep.subr.mxu0 0.0
  %823 = vmatpush1.msra.mxu0 0.0
  %824 = vmatprep.subr.mxu0 0.0
  %825 = vmatpush1.msra.mxu0 0.0
  %826 = vmatprep.subr.mxu0 0.0
  %827 = vmatpush1.msra.mxu0 0.0
  %828 = vmatprep.subr.mxu0 0.0
  %829 = vmatpush1.msra.mxu0 0.0
  %830 = vmatprep.subr.mxu0 0.0
  %831 = vmatpush1.msra.mxu0 0.0
  %832 = vmatprep.subr.mxu0 0.0
  %833 = vmatpush1.msra.mxu0 0.0
  %834 = vmatprep.subr.mxu0 0.0
  %835 = vmatpush1.msra.mxu0 0.0
  %836 = vmatprep.subr.mxu0 0.0
  %837 = vmatpush1.msra.mxu0 0.0
  %838 = vmatprep.subr.mxu0 0.0
  %839 = vmatpush1.msra.mxu0 0.0
  %840 = vmatprep.subr.mxu0 0.0
  %841 = vmatpush1.msra.mxu0 0.0
  %842 = vmatprep.subr.mxu0 0.0
  %843 = vmatpush1.msra.mxu0 0.0
  %844 = vmatprep.subr.mxu0 0.0
  %845 = vmatpush1.msra.mxu0 0.0
  %846 = vmatprep.subr.mxu0 0.0
  %847 = vmatpush1.msra.mxu0 0.0
  %848 = vmatprep.subr.mxu0 0.0
  %849 = vmatpush1.msra.mxu0 0.0
  %850 = vmatprep.mubr.f32.mxu0 0.0
  %851 = vmatmul.mubr.f32.gmra.mrb[0].mxu0 %v784
  %v852 = vpop.f32.mrb[0].mxu0
  %v853 = vadd.f32 0.0, %v852
  %v854 = vpop.f32.mrb[0].mxu0
  %v855 = vadd.f32 0.0, %v854
  %856 = vdwg.mxu0
  %v857 = vadd.f32 %v181, %v853
  %v858 = vadd.f32 %v183, %v855
  %v859 = vtanh.pop %v857
  %v860 = vtanh.pop %v858
  %v861 = vmul.f32 %v859, %v23
  %v862 = vmul.f32 %v860, %v24
  %v863 = vadd.f32 %v861, %v25
  %v864 = vadd.f32 %v862, %v26
  %v865 = vmul.f32 %v863, %v778
  %v866 = vmul.f32 %v863, %v864
  %868 = vrot.lane.b32.xlu0 %v866, 64
  %v869 = vpop.permute.xlu0 %868
  %v871 = vadd.f32 %v865, %v869
  %v872 = vtanh.pop %v871
  %v873 = vmul.f32 %v864, %v872
  %875 = vrot.lane.b32.xlu0 %v873, 64
  %v876 = vpop.permute.xlu0 %875
  %v877 = vsel %vm225, %v876, 0
  %879 = vmatprep.subr.mxu0 %v192
  %880 = vmatpush1.msra.mxu0 %v191
  %881 = vmatprep.subr.mxu0 %v194
  %882 = vmatpush1.msra.mxu0 %v193
  %883 = vmatprep.subr.mxu0 %v196
  %884 = vmatpush1.msra.mxu0 %v195
  %885 = vmatprep.subr.mxu0 %v198
  %886 = vmatpush1.msra.mxu0 %v197
  %887 = vmatprep.subr.mxu0 %v200
  %888 = vmatpush1.msra.mxu0 %v199
  %889 = vmatprep.subr.mxu0 %v202
  %890 = vmatpush1.msra.mxu0 %v201
  %891 = vmatprep.subr.mxu0 %v204
  %892 = vmatpush1.msra.mxu0 %v203
  %893 = vmatprep.subr.mxu0 %v206
  %894 = vmatpush1.msra.mxu0 %v205
  %895 = vmatprep.subr.mxu0 0.0
  %896 = vmatpush1.msra.mxu0 0.0
  %897 = vmatprep.subr.mxu0 0.0
  %898 = vmatpush1.msra.mxu0 0.0
  %899 = vmatprep.subr.mxu0 0.0
  %900 = vmatpush1.msra.mxu0 0.0
  %901 = vmatprep.subr.mxu0 0.0
  %902 = vmatpush1.msra.mxu0 0.0
  %903 = vmatprep.subr.mxu0 0.0
  %904 = vmatpush1.msra.mxu0 0.0
  %905 = vmatprep.subr.mxu0 0.0
  %906 = vmatpush1.msra.mxu0 0.0
  %907 = vmatprep.subr.mxu0 0.0
  %908 = vmatpush1.msra.mxu0 0.0
  %909 = vmatprep.subr.mxu0 0.0
  %910 = vmatpush1.msra.mxu0 0.0
  %911 = vmatprep.subr.mxu0 0.0
  %912 = vmatpush1.msra.mxu0 0.0
  %913 = vmatprep.subr.mxu0 0.0
  %914 = vmatpush1.msra.mxu0 0.0
  %915 = vmatprep.subr.mxu0 0.0
  %916 = vmatpush1.msra.mxu0 0.0
  %917 = vmatprep.subr.mxu0 0.0
  %918 = vmatpush1.msra.mxu0 0.0
  %919 = vmatprep.subr.mxu0 0.0
  %920 = vmatpush1.msra.mxu0 0.0
  %921 = vmatprep.subr.mxu0 0.0
  %922 = vmatpush1.msra.mxu0 0.0
  %923 = vmatprep.subr.mxu0 0.0
  %924 = vmatpush1.msra.mxu0 0.0
  %925 = vmatprep.subr.mxu0 0.0
  %926 = vmatpush1.msra.mxu0 0.0
  %927 = vmatprep.subr.mxu0 0.0
  %928 = vmatpush1.msra.mxu0 0.0
  %929 = vmatprep.subr.mxu0 0.0
  %930 = vmatpush1.msra.mxu0 0.0
  %931 = vmatprep.subr.mxu0 0.0
  %932 = vmatpush1.msra.mxu0 0.0
  %933 = vmatprep.subr.mxu0 0.0
  %934 = vmatpush1.msra.mxu0 0.0
  %935 = vmatprep.subr.mxu0 0.0
  %936 = vmatpush1.msra.mxu0 0.0
  %937 = vmatprep.subr.mxu0 0.0
  %938 = vmatpush1.msra.mxu0 0.0
  %939 = vmatprep.subr.mxu0 0.0
  %940 = vmatpush1.msra.mxu0 0.0
  %941 = vmatprep.subr.mxu0 0.0
  %942 = vmatpush1.msra.mxu0 0.0
  %943 = vmatprep.mubr.f32.mxu0 0.0
  %944 = vmatmul.mubr.f32.gmra.mrb[0].mxu0 %v877
  %v945 = vpop.f32.mrb[0].mxu0
  %v946 = vadd.f32 0.0, %v945
  %v947 = vpop.f32.mrb[0].mxu0
  %v948 = vadd.f32 0.0, %v947
  %949 = vdwg.mxu0
  %v950 = vadd.f32 %v187, %v946
  %v951 = vadd.f32 %v189, %v948
  %v952 = vtanh.pop %v950
  %v953 = vtanh.pop %v951
  %v954 = vmul.f32 %v952, %v23
  %v955 = vmul.f32 %v953, %v24
  %v956 = vadd.f32 %v954, %v25
  %v957 = vadd.f32 %v955, %v26
  %v958 = vmul.f32 %v956, %v871
  %v959 = vmul.f32 %v956, %v957
  %961 = vrot.lane.b32.xlu0 %v959, 64
  %v962 = vpop.permute.xlu0 %961
  %v964 = vadd.f32 %v958, %v962
  %v965 = vtanh.pop %v964
  %v966 = vmul.f32 %v957, %v965
  %967 = vrot.lane.b32.xlu0 %v315, 32
  %v968 = vpop.permute.xlu0 %967
  %971 = vrot.lane.b32.xlu0 %v501, 96
  %v972 = vpop.permute.xlu0 %971
  %974 = vrot.lane.b32.xlu0 %v687, 32
  %v975 = vpop.permute.xlu0 %974
  %978 = vrot.lane.b32.xlu0 %v873, 96
  %v979 = vpop.permute.xlu0 %978
  %v981 = vsel %vm44, %v968, %v411
  %v982 = vsel %vm225, %v981, %v972
  %vm983 = vcmask 785408
  %v984 = vsel %vm983, %v982, %v594
  %v985 = vsel %vm44, %v975, %v783
  %v986 = vsel %vm225, %v985, %v979
  %v987 = vsel %vm983, %v986, %v966
  %988 = vst [vmem:[%s3] sm:$0xff] %v984
  %989 = vst [vmem:[%s3 + $0x8] sm:$0xff] %v987
  // Predicated region
  $region14: #{lstm_encoder.1} parent=0 // pred_check
    _
  $region15: #{lstm_encoder.1} parent=0 // pred_check_branch
    %991 = sbr.rel (0) target = $region17
  $region16: #{lstm_encoder.1} parent=0 // pred_region
    _
  $region17: #{lstm_encoder.1} parent=0 // pred_fallthru
    _
  // Predicated region
  $region18: #{lstm_encoder.1} parent=0 // pred_check
    _
  $region19: #{lstm_encoder.1} parent=0 // pred_check_branch
    %993 = sbr.rel (0) target = $region21
  $region20: #{lstm_encoder.1} parent=0 // pred_region
    _
  $region21: #{lstm_encoder.1} parent=0 // pred_fallthru
    _

</llo_original>
